<compile_context>
chip_gen: v7x
topology: tpu7x:2x2x1
jax: 0.10.0
libtpu: 0.0.40
codegen_flags: <defaults>
</compile_context>

<pallas_src>
import math
import functools

import jax
import jax.numpy as jnp
from jax.experimental import pallas as pl
from jax.experimental.pallas import tpu as pltpu


# ---------------------------------------------------------------------------
# Helpers
# ---------------------------------------------------------------------------
def _seq_tile(s, preferred=256):
    """Largest multiple of 8 that divides s, capped at `preferred`; otherwise
    the full extent (always a legal block size)."""
    if s <= preferred:
        return s
    t = (preferred // 8) * 8
    while t >= 8:
        if s % t == 0:
            return t
        t -= 8
    return s


def _padded_bytes(shape, dtype):
    """Approximate VMEM footprint of a block: last dim padded to 128 lanes,
    second-last to 8 sublanes."""
    s = list(shape)
    if len(s) >= 1:
        s[-1] = pl.cdiv(s[-1], 128) * 128
    if len(s) >= 2:
        s[-2] = pl.cdiv(s[-2], 8) * 8
    n = 1
    for d in s:
        n *= int(d)
    return n * jnp.dtype(dtype).itemsize


def _vmem_budget(block_shapes, scratch_shapes=()):
    """Derive a scoped-VMEM budget: 2x (double-buffered) per BlockSpec block,
    1x per scratch, +50% / +4 MiB headroom, clamped to [16 MiB, 96 MiB]."""
    need = 2 * sum(_padded_bytes(s, d) for s, d in block_shapes)
    need += sum(_padded_bytes(s, d) for s, d in scratch_shapes)
    need = int(need * 1.5) + (4 << 20)
    return max(16 << 20, min(need, 96 << 20))


# ---------------------------------------------------------------------------
# Kernel 1: fused QKV projection, head-major stacked output, Q pre-scaled
# ---------------------------------------------------------------------------
def _qkv_proj_kernel(x_ref, w_ref, b_ref, kv_ref, q_ref, *, heads, head_dim, scale):
    x = x_ref[0]                                                     # (ts, D)
    # One wide (D, 3D) matmul; W_qkv has a constant block index so it is DMA'd
    # into VMEM exactly once for the whole grid.
    y = jnp.dot(x, w_ref[...], preferred_element_type=jnp.float32) + b_ref[...]
    d = heads * head_dim
    # Per-head lane-slice stores (static loop): no reshape/transpose relayout.
    for h in range(heads):
        lo = h * head_dim
        q_h = y[:, lo:lo + head_dim] * scale          # fold 1/sqrt(hd) into Q once
        k_h = y[:, d + lo:d + lo + head_dim]
        v_h = y[:, 2 * d + lo:2 * d + lo + head_dim]
        kv_ref[0, 0, h] = k_h.astype(kv_ref.dtype)
        kv_ref[0, 1, h] = v_h.astype(kv_ref.dtype)
        q_ref[0, h] = q_h.astype(q_ref.dtype)


# ---------------------------------------------------------------------------
# Kernel 2: flash attention (online softmax), all heads per step, fused out-proj
# ---------------------------------------------------------------------------
def _flash_attn_outproj_kernel(kv_ref, q_ref, wo_ref, bo_ref, o_ref,
                               m_sc, l_sc, acc_sc, *, heads):
    ki = pl.program_id(2)
    last_kv = pl.num_programs(2) - 1

    @pl.when(ki == 0)
    def _init_state():
        m_sc[...] = jnp.full(m_sc.shape, -jnp.inf, m_sc.dtype)
        l_sc[...] = jnp.zeros(l_sc.shape, l_sc.dtype)
        acc_sc[...] = jnp.zeros(acc_sc.shape, acc_sc.dtype)

    # Static (unrolled) loop over heads: one grid step handles every head, so
    # K/V tiles are fetched once per (b, qi, ki) and grid steps drop by H.
    # Scores tile is only (tq, tk); (H, S, S) is never materialized.
    for h in range(heads):
        q = q_ref[0, h]                                              # (tq, hd), pre-scaled
        k = kv_ref[0, 0, h]                                          # (tk, hd)
        v = kv_ref[0, 1, h]                                          # (tk, hd)

        s = jax.lax.dot_general(q, k, (((1,), (1,)), ((), ())),
                                preferred_element_type=jnp.float32)  # (tq, tk)

        m_prev = m_sc[h]                                             # (tq, 1)
        m_new = jnp.maximum(m_prev, jnp.max(s, axis=-1, keepdims=True))
        alpha = jnp.exp(m_prev - m_new)
        p = jnp.exp(s - m_new)
        l_sc[h] = alpha * l_sc[h] + jnp.sum(p, axis=-1, keepdims=True)
        acc_sc[h] = alpha * acc_sc[h] + jnp.dot(p.astype(v.dtype), v,
                                                preferred_element_type=jnp.float32)
        m_sc[h] = m_new

    # NOTE: correctness relies on the kv axis staying innermost/"arbitrary";
    # b / q-tile axes are safe to keep "parallel" (state is reset at ki == 0).
    @pl.when(ki == last_kv)
    def _finalize():
        outs = []
        for h in range(heads):
            l = l_sc[h]
            inv = pl.reciprocal(l, approx=True)       # EUP vrcp (free slot)
            inv = inv * (2.0 - l * inv)                # one Newton step, finalize-only (f32 accuracy)
            outs.append(acc_sc[h] * inv)               # (tq, hd)
        # Merge heads once per q-tile, then ONE K=D matmul against the resident Wo
        # (full MXU contraction depth instead of H narrow K=hd matmuls).
        attn = jnp.concatenate(outs, axis=-1)          # (tq, D)
        o_ref[0] = (jnp.dot(attn.astype(wo_ref.dtype), wo_ref[...],
                            preferred_element_type=jnp.float32)
                    + bo_ref[...]).astype(o_ref.dtype)


# ---------------------------------------------------------------------------
# Parameter fusion (hoisted: do this once at parameter-load time, not per call)
# ---------------------------------------------------------------------------
def fuse_params(params):
    return {
        "w_qkv": jnp.concatenate([params["wq"], params["wk"], params["wv"]], axis=1),  # (D, 3D)
        "b_qkv": jnp.concatenate([params["bq"], params["bk"], params["bv"]], axis=1),  # (1, 3D)
        "w_out": params["wo"],                                                          # (D, D)
        "b_out": params["bo"],                                                          # (1, D)
    }


# ---------------------------------------------------------------------------
# Wrapper
# ---------------------------------------------------------------------------
def self_attention_pallas(x, fused_params, heads, *, seq_tile=256, qkv_dtype=None):
    """x: (B, S, D); fused_params: output of fuse_params(). seq_tile: 256 is a
    good default for v6e/v7x (MXU-aligned); use 128 on v5e, up to 512 on v6e.
    qkv_dtype: dtype for the q/k/v intermediate (bf16 recommended on v5e)."""
    B, S, D = x.shape
    assert D % heads == 0, "dim must be divisible by heads"
    hd = D // heads
    qkv_dtype = qkv_dtype or x.dtype

    w_qkv = fused_params["w_qkv"]
    b_qkv = fused_params["b_qkv"]
    w_out = fused_params["w_out"]
    b_out = fused_params["b_out"]

    scale = 1.0 / math.sqrt(hd)

    # ---- Kernel 1: fused QKV projection -------------------------------------
    ts = _seq_tile(S, seq_tile)
    kv_shape = jax.ShapeDtypeStruct((B, 2, heads, S, hd), qkv_dtype)   # [K, V] stacked
    q_shape = jax.ShapeDtypeStruct((B, heads, S, hd), qkv_dtype)

    vmem1 = _vmem_budget(
        [((1, ts, D), x.dtype), ((D, 3 * D), w_qkv.dtype), ((1, 3 * D), b_qkv.dtype),
         ((1, 2, heads, ts, hd), qkv_dtype), ((1, heads, ts, hd), qkv_dtype)])

    kv, q = pl.pallas_call(
        functools.partial(_qkv_proj_kernel, heads=heads, head_dim=hd, scale=scale),
        out_shape=(kv_shape, q_shape),
        grid_spec=pltpu.PrefetchScalarGridSpec(
            num_scalar_prefetch=0,
            grid=(B, S // ts),
            in_specs=[
                pl.BlockSpec((1, ts, D), lambda b, si: (b, si, 0)),    # x tile
                pl.BlockSpec((D, 3 * D), lambda b, si: (0, 0)),        # W_qkv (constant -> fetched once)
                pl.BlockSpec((1, 3 * D), lambda b, si: (0, 0)),        # b_qkv
            ],
            out_specs=[
                pl.BlockSpec((1, 2, heads, ts, hd), lambda b, si: (b, 0, 0, si, 0)),
                pl.BlockSpec((1, heads, ts, hd), lambda b, si: (b, 0, si, 0)),
            ],
        ),
        compiler_params=pltpu.CompilerParams(
            dimension_semantics=("parallel", "parallel"),
            vmem_limit_bytes=vmem1,
        ),
    )(x, w_qkv, b_qkv)

    # ---- Kernel 2: flash attention + fused output projection ----------------
    tq = _seq_tile(S, seq_tile)
    tk = _seq_tile(S, seq_tile)

    vmem2 = _vmem_budget(
        [((1, 2, heads, tk, hd), qkv_dtype), ((1, heads, tq, hd), qkv_dtype),
         ((D, D), w_out.dtype), ((1, D), b_out.dtype), ((1, tq, D), x.dtype)],
        [((heads, tq, 1), jnp.float32), ((heads, tq, 1), jnp.float32),
         ((heads, tq, hd), jnp.float32)])

    out = pl.pallas_call(
        functools.partial(_flash_attn_outproj_kernel, heads=heads),
        out_shape=jax.ShapeDtypeStruct((B, S, D), x.dtype),
        grid_spec=pltpu.PrefetchScalarGridSpec(
            num_scalar_prefetch=0,
            # reduction (kv) axis last; batch / q-tile parallel for megacore / v7x 2-TC
            grid=(B, S // tq, S // tk),
            in_specs=[
                pl.BlockSpec((1, 2, heads, tk, hd), lambda b, qi, ki: (b, 0, 0, ki, 0)),  # K,V
                pl.BlockSpec((1, heads, tq, hd), lambda b, qi, ki: (b, 0, qi, 0)),        # Q
                pl.BlockSpec((D, D), lambda b, qi, ki: (0, 0)),       # Wo resident (fetched once)
                pl.BlockSpec((1, D), lambda b, qi, ki: (0, 0)),       # bo
            ],
            out_specs=pl.BlockSpec((1, tq, D), lambda b, qi, ki: (b, qi, 0)),
            scratch_shapes=[
                pltpu.VMEM((heads, tq, 1), jnp.float32),    # running max m (per head)
                pltpu.VMEM((heads, tq, 1), jnp.float32),    # running sum l (per head)
                pltpu.VMEM((heads, tq, hd), jnp.float32),   # per-head attention accumulator
            ],
        ),
        compiler_params=pltpu.CompilerParams(
            dimension_semantics=("parallel", "parallel", "arbitrary"),
            vmem_limit_bytes=vmem2,
        ),
    )(kv, q, w_out, b_out)

    return out


# ---------------------------------------------------------------------------
# Pure-JAX reference (mirrors the PyTorch forward in eval mode)
# ---------------------------------------------------------------------------
def _reference(x, params, heads):
    B, S, D = x.shape
    hd = D // heads

    def lin(z, w, b):
        return jnp.dot(z, w) + b[0]

    q = lin(x, params["wq"], params["bq"]).reshape(B, S, heads, hd).transpose(0, 2, 1, 3)
    k = lin(x, params["wk"], params["bk"]).reshape(B, S, heads, hd).transpose(0, 2, 1, 3)
    v = lin(x, params["wv"], params["bv"]).reshape(B, S, heads, hd).transpose(0, 2, 1, 3)
    scores = jnp.einsum('bhqd,bhkd->bhqk', q, k) / math.sqrt(hd)
    attn = jax.nn.softmax(scores, axis=-1)
    out = jnp.einsum('bhqk,bhkd->bhqd', attn, v)
    out = out.transpose(0, 2, 1, 3).reshape(B, S, D)
    return lin(out, params["wo"], params["bo"])


def init_params(key, dim):
    """nn.Linear-style init (uniform +/- 1/sqrt(fan_in)); weights stored as (in, out)."""
    bound = 1.0 / math.sqrt(dim)
    keys = jax.random.split(key, 8)
    def w(k): return jax.random.uniform(k, (dim, dim), jnp.float32, -bound, bound)
    def b(k): return jax.random.uniform(k, (1, dim), jnp.float32, -bound, bound)
    return {
        "wq": w(keys[0]), "bq": b(keys[1]),
        "wk": w(keys[2]), "bk": b(keys[3]),
        "wv": w(keys[4]), "bv": b(keys[5]),
        "wo": w(keys[6]), "bo": b(keys[7]),
    }


if __name__ == "__main__":
    B, S, D, H = 2, 8, 32, 4

    key = jax.random.PRNGKey(0)
    k_x, k_p = jax.random.split(key)
    x = jax.random.normal(k_x, (B, S, D), jnp.float32)
    params = init_params(k_p, D)

    # Weight fusion hoisted: done once at parameter-load time, not per forward call.
    fused = fuse_params(params)

    out = self_attention_pallas(x, fused, heads=H)
    out = jax.block_until_ready(out)

    ref = _reference(x, params, heads=H)
    assert out.shape == (B, S, D)
    assert jnp.allclose(out, ref, atol=1e-4, rtol=1e-4), "mismatch vs reference"

    print("KERNEL_OK")
</pallas_src>

<mosaic_0001>
module attributes {stable_mosaic.version = 11 : i64} {
  func.func @_qkv_proj_kernel(%arg0: i32, %arg1: i32, %arg2: memref<1x8x32xf32, #tpu.memory_space<vmem>>, %arg3: memref<32x96xf32, #tpu.memory_space<vmem>>, %arg4: memref<1x96xf32, #tpu.memory_space<vmem>>, %arg5: memref<1x2x4x8x8xf32, #tpu.memory_space<vmem>>, %arg6: memref<1x4x8x8xf32, #tpu.memory_space<vmem>>) attributes {dimension_semantics = [#tpu.dimension_semantics<parallel>, #tpu.dimension_semantics<parallel>], iteration_bounds = array<i64: 2, 1>, scalar_prefetch = 0 : i64, scratch_operands = 0 : i64, tpu.core_type = #tpu.core_type<tc>, window_params = [{transform_indices = @transform_0, window_bounds = array<i64: 1, 8, 32>}, {pipeline_mode = #tpu.pipeline_mode<synchronous>, transform_indices = @transform_1, window_bounds = array<i64: 32, 96>}, {pipeline_mode = #tpu.pipeline_mode<synchronous>, transform_indices = @transform_2, window_bounds = array<i64: 1, 96>}, {transform_indices = @transform_3, window_bounds = array<i64: 1, 2, 4, 8, 8>}, {transform_indices = @transform_4, window_bounds = array<i64: 1, 4, 8, 8>}]} {
    %c0 = arith.constant 0 : index
    %c0_0 = arith.constant 0 : index
    %c0_1 = arith.constant 0 : index
    %0 = vector.load %arg2[%c0, %c0_0, %c0_1] : memref<1x8x32xf32, #tpu.memory_space<vmem>>, vector<1x8x32xf32>
    %1 = vector.shape_cast %0 : vector<1x8x32xf32> to vector<8x32xf32>
    %c0_2 = arith.constant 0 : index
    %c0_3 = arith.constant 0 : index
    %2 = vector.load %arg3[%c0_2, %c0_3] : memref<32x96xf32, #tpu.memory_space<vmem>>, vector<32x96xf32>
    %cst = arith.constant dense<0.000000e+00> : vector<8x96xf32>
    %3 = tpu.matmul %1, %2, %cst {dimension_numbers = #tpu.dot_dimension_numbers<[1], [0], [0], [1], [0, 0, 1, 1], [], []>} : vector<8x32xf32>, vector<32x96xf32>, vector<8x96xf32> -> vector<8x96xf32>
    %c0_4 = arith.constant 0 : index
    %c0_5 = arith.constant 0 : index
    %4 = vector.load %arg4[%c0_4, %c0_5] : memref<1x96xf32, #tpu.memory_space<vmem>>, vector<1x96xf32>
    %5 = vector.broadcast %4 : vector<1x96xf32> to vector<8x96xf32>
    %6 = arith.addf %3, %5 : vector<8x96xf32>
    %7 = vector.extract_strided_slice %6 {offsets = [0, 0], sizes = [8, 8], strides = [1, 1]} : vector<8x96xf32> to vector<8x8xf32>
    %cst_6 = arith.constant 0.353553385 : f32
    %8 = vector.broadcast %cst_6 : f32 to vector<8x8xf32>
    %9 = arith.mulf %7, %8 : vector<8x8xf32>
    %10 = vector.extract_strided_slice %6 {offsets = [0, 32], sizes = [8, 8], strides = [1, 1]} : vector<8x96xf32> to vector<8x8xf32>
    %11 = vector.extract_strided_slice %6 {offsets = [0, 64], sizes = [8, 8], strides = [1, 1]} : vector<8x96xf32> to vector<8x8xf32>
    %c0_7 = arith.constant 0 : index
    %c0_8 = arith.constant 0 : index
    %c0_9 = arith.constant 0 : index
    %c0_10 = arith.constant 0 : index
    %c0_11 = arith.constant 0 : index
    %12 = vector.load %arg5[%c0_7, %c0_8, %c0_9, %c0_10, %c0_11] : memref<1x2x4x8x8xf32, #tpu.memory_space<vmem>>, vector<1x1x1x8x8xf32>
    %13 = vector.shape_cast %12 : vector<1x1x1x8x8xf32> to vector<8x8xf32>
    %14 = vector.shape_cast %10 : vector<8x8xf32> to vector<1x1x1x8x8xf32>
    tpu.vector_store %arg5[%c0_7, %c0_8, %c0_9, %c0_10, %c0_11], %14 {strides = array<i32>} : memref<1x2x4x8x8xf32, #tpu.memory_space<vmem>>, vector<1x1x1x8x8xf32>,
    %c0_12 = arith.constant 0 : index
    %c1 = arith.constant 1 : index
    %c0_13 = arith.constant 0 : index
    %c0_14 = arith.constant 0 : index
    %c0_15 = arith.constant 0 : index
    %15 = vector.load %arg5[%c0_12, %c1, %c0_13, %c0_14, %c0_15] : memref<1x2x4x8x8xf32, #tpu.memory_space<vmem>>, vector<1x1x1x8x8xf32>
    %16 = vector.shape_cast %15 : vector<1x1x1x8x8xf32> to vector<8x8xf32>
    %17 = vector.shape_cast %11 : vector<8x8xf32> to vector<1x1x1x8x8xf32>
    tpu.vector_store %arg5[%c0_12, %c1, %c0_13, %c0_14, %c0_15], %17 {strides = array<i32>} : memref<1x2x4x8x8xf32, #tpu.memory_space<vmem>>, vector<1x1x1x8x8xf32>,
    %c0_16 = arith.constant 0 : index
    %c0_17 = arith.constant 0 : index
    %c0_18 = arith.constant 0 : index
    %c0_19 = arith.constant 0 : index
    %18 = vector.load %arg6[%c0_16, %c0_17, %c0_18, %c0_19] : memref<1x4x8x8xf32, #tpu.memory_space<vmem>>, vector<1x1x8x8xf32>
    %19 = vector.shape_cast %18 : vector<1x1x8x8xf32> to vector<8x8xf32>
    %20 = vector.shape_cast %9 : vector<8x8xf32> to vector<1x1x8x8xf32>
    tpu.vector_store %arg6[%c0_16, %c0_17, %c0_18, %c0_19], %20 {strides = array<i32>} : memref<1x4x8x8xf32, #tpu.memory_space<vmem>>, vector<1x1x8x8xf32>,
    %21 = vector.extract_strided_slice %6 {offsets = [0, 8], sizes = [8, 8], strides = [1, 1]} : vector<8x96xf32> to vector<8x8xf32>
    %cst_20 = arith.constant 0.353553385 : f32
    %22 = vector.broadcast %cst_20 : f32 to vector<8x8xf32>
    %23 = arith.mulf %21, %22 : vector<8x8xf32>
    %24 = vector.extract_strided_slice %6 {offsets = [0, 40], sizes = [8, 8], strides = [1, 1]} : vector<8x96xf32> to vector<8x8xf32>
    %25 = vector.extract_strided_slice %6 {offsets = [0, 72], sizes = [8, 8], strides = [1, 1]} : vector<8x96xf32> to vector<8x8xf32>
    %c0_21 = arith.constant 0 : index
    %c0_22 = arith.constant 0 : index
    %c1_23 = arith.constant 1 : index
    %c0_24 = arith.constant 0 : index
    %c0_25 = arith.constant 0 : index
    %26 = vector.load %arg5[%c0_21, %c0_22, %c1_23, %c0_24, %c0_25] : memref<1x2x4x8x8xf32, #tpu.memory_space<vmem>>, vector<1x1x1x8x8xf32>
    %27 = vector.shape_cast %26 : vector<1x1x1x8x8xf32> to vector<8x8xf32>
    %28 = vector.shape_cast %24 : vector<8x8xf32> to vector<1x1x1x8x8xf32>
    tpu.vector_store %arg5[%c0_21, %c0_22, %c1_23, %c0_24, %c0_25], %28 {strides = array<i32>} : memref<1x2x4x8x8xf32, #tpu.memory_space<vmem>>, vector<1x1x1x8x8xf32>,
    %c0_26 = arith.constant 0 : index
    %c1_27 = arith.constant 1 : index
    %c1_28 = arith.constant 1 : index
    %c0_29 = arith.constant 0 : index
    %c0_30 = arith.constant 0 : index
    %29 = vector.load %arg5[%c0_26, %c1_27, %c1_28, %c0_29, %c0_30] : memref<1x2x4x8x8xf32, #tpu.memory_space<vmem>>, vector<1x1x1x8x8xf32>
    %30 = vector.shape_cast %29 : vector<1x1x1x8x8xf32> to vector<8x8xf32>
    %31 = vector.shape_cast %25 : vector<8x8xf32> to vector<1x1x1x8x8xf32>
    tpu.vector_store %arg5[%c0_26, %c1_27, %c1_28, %c0_29, %c0_30], %31 {strides = array<i32>} : memref<1x2x4x8x8xf32, #tpu.memory_space<vmem>>, vector<1x1x1x8x8xf32>,
    %c0_31 = arith.constant 0 : index
    %c1_32 = arith.constant 1 : index
    %c0_33 = arith.constant 0 : index
    %c0_34 = arith.constant 0 : index
    %32 = vector.load %arg6[%c0_31, %c1_32, %c0_33, %c0_34] : memref<1x4x8x8xf32, #tpu.memory_space<vmem>>, vector<1x1x8x8xf32>
    %33 = vector.shape_cast %32 : vector<1x1x8x8xf32> to vector<8x8xf32>
    %34 = vector.shape_cast %23 : vector<8x8xf32> to vector<1x1x8x8xf32>
    tpu.vector_store %arg6[%c0_31, %c1_32, %c0_33, %c0_34], %34 {strides = array<i32>} : memref<1x4x8x8xf32, #tpu.memory_space<vmem>>, vector<1x1x8x8xf32>,
    %35 = vector.extract_strided_slice %6 {offsets = [0, 16], sizes = [8, 8], strides = [1, 1]} : vector<8x96xf32> to vector<8x8xf32>
    %cst_35 = arith.constant 0.353553385 : f32
    %36 = vector.broadcast %cst_35 : f32 to vector<8x8xf32>
    %37 = arith.mulf %35, %36 : vector<8x8xf32>
    %38 = vector.extract_strided_slice %6 {offsets = [0, 48], sizes = [8, 8], strides = [1, 1]} : vector<8x96xf32> to vector<8x8xf32>
    %39 = vector.extract_strided_slice %6 {offsets = [0, 80], sizes = [8, 8], strides = [1, 1]} : vector<8x96xf32> to vector<8x8xf32>
    %c0_36 = arith.constant 0 : index
    %c0_37 = arith.constant 0 : index
    %c2 = arith.constant 2 : index
    %c0_38 = arith.constant 0 : index
    %c0_39 = arith.constant 0 : index
    %40 = vector.load %arg5[%c0_36, %c0_37, %c2, %c0_38, %c0_39] : memref<1x2x4x8x8xf32, #tpu.memory_space<vmem>>, vector<1x1x1x8x8xf32>
    %41 = vector.shape_cast %40 : vector<1x1x1x8x8xf32> to vector<8x8xf32>
    %42 = vector.shape_cast %38 : vector<8x8xf32> to vector<1x1x1x8x8xf32>
    tpu.vector_store %arg5[%c0_36, %c0_37, %c2, %c0_38, %c0_39], %42 {strides = array<i32>} : memref<1x2x4x8x8xf32, #tpu.memory_space<vmem>>, vector<1x1x1x8x8xf32>,
    %c0_40 = arith.constant 0 : index
    %c1_41 = arith.constant 1 : index
    %c2_42 = arith.constant 2 : index
    %c0_43 = arith.constant 0 : index
    %c0_44 = arith.constant 0 : index
    %43 = vector.load %arg5[%c0_40, %c1_41, %c2_42, %c0_43, %c0_44] : memref<1x2x4x8x8xf32, #tpu.memory_space<vmem>>, vector<1x1x1x8x8xf32>
    %44 = vector.shape_cast %43 : vector<1x1x1x8x8xf32> to vector<8x8xf32>
    %45 = vector.shape_cast %39 : vector<8x8xf32> to vector<1x1x1x8x8xf32>
    tpu.vector_store %arg5[%c0_40, %c1_41, %c2_42, %c0_43, %c0_44], %45 {strides = array<i32>} : memref<1x2x4x8x8xf32, #tpu.memory_space<vmem>>, vector<1x1x1x8x8xf32>,
    %c0_45 = arith.constant 0 : index
    %c2_46 = arith.constant 2 : index
    %c0_47 = arith.constant 0 : index
    %c0_48 = arith.constant 0 : index
    %46 = vector.load %arg6[%c0_45, %c2_46, %c0_47, %c0_48] : memref<1x4x8x8xf32, #tpu.memory_space<vmem>>, vector<1x1x8x8xf32>
    %47 = vector.shape_cast %46 : vector<1x1x8x8xf32> to vector<8x8xf32>
    %48 = vector.shape_cast %37 : vector<8x8xf32> to vector<1x1x8x8xf32>
    tpu.vector_store %arg6[%c0_45, %c2_46, %c0_47, %c0_48], %48 {strides = array<i32>} : memref<1x4x8x8xf32, #tpu.memory_space<vmem>>, vector<1x1x8x8xf32>,
    %49 = vector.extract_strided_slice %6 {offsets = [0, 24], sizes = [8, 8], strides = [1, 1]} : vector<8x96xf32> to vector<8x8xf32>
    %cst_49 = arith.constant 0.353553385 : f32
    %50 = vector.broadcast %cst_49 : f32 to vector<8x8xf32>
    %51 = arith.mulf %49, %50 : vector<8x8xf32>
    %52 = vector.extract_strided_slice %6 {offsets = [0, 56], sizes = [8, 8], strides = [1, 1]} : vector<8x96xf32> to vector<8x8xf32>
    %53 = vector.extract_strided_slice %6 {offsets = [0, 88], sizes = [8, 8], strides = [1, 1]} : vector<8x96xf32> to vector<8x8xf32>
    %c0_50 = arith.constant 0 : index
    %c0_51 = arith.constant 0 : index
    %c3 = arith.constant 3 : index
    %c0_52 = arith.constant 0 : index
    %c0_53 = arith.constant 0 : index
    %54 = vector.load %arg5[%c0_50, %c0_51, %c3, %c0_52, %c0_53] : memref<1x2x4x8x8xf32, #tpu.memory_space<vmem>>, vector<1x1x1x8x8xf32>
    %55 = vector.shape_cast %54 : vector<1x1x1x8x8xf32> to vector<8x8xf32>
    %56 = vector.shape_cast %52 : vector<8x8xf32> to vector<1x1x1x8x8xf32>
    tpu.vector_store %arg5[%c0_50, %c0_51, %c3, %c0_52, %c0_53], %56 {strides = array<i32>} : memref<1x2x4x8x8xf32, #tpu.memory_space<vmem>>, vector<1x1x1x8x8xf32>,
    %c0_54 = arith.constant 0 : index
    %c1_55 = arith.constant 1 : index
    %c3_56 = arith.constant 3 : index
    %c0_57 = arith.constant 0 : index
    %c0_58 = arith.constant 0 : index
    %57 = vector.load %arg5[%c0_54, %c1_55, %c3_56, %c0_57, %c0_58] : memref<1x2x4x8x8xf32, #tpu.memory_space<vmem>>, vector<1x1x1x8x8xf32>
    %58 = vector.shape_cast %57 : vector<1x1x1x8x8xf32> to vector<8x8xf32>
    %59 = vector.shape_cast %53 : vector<8x8xf32> to vector<1x1x1x8x8xf32>
    tpu.vector_store %arg5[%c0_54, %c1_55, %c3_56, %c0_57, %c0_58], %59 {strides = array<i32>} : memref<1x2x4x8x8xf32, #tpu.memory_space<vmem>>, vector<1x1x1x8x8xf32>,
    %c0_59 = arith.constant 0 : index
    %c3_60 = arith.constant 3 : index
    %c0_61 = arith.constant 0 : index
    %c0_62 = arith.constant 0 : index
    %60 = vector.load %arg6[%c0_59, %c3_60, %c0_61, %c0_62] : memref<1x4x8x8xf32, #tpu.memory_space<vmem>>, vector<1x1x8x8xf32>
    %61 = vector.shape_cast %60 : vector<1x1x8x8xf32> to vector<8x8xf32>
    %62 = vector.shape_cast %51 : vector<8x8xf32> to vector<1x1x8x8xf32>
    tpu.vector_store %arg6[%c0_59, %c3_60, %c0_61, %c0_62], %62 {strides = array<i32>} : memref<1x4x8x8xf32, #tpu.memory_space<vmem>>, vector<1x1x8x8xf32>,
    return
  }
  func.func @transform_0(%arg0: i32, %arg1: i32) -> (i32, i32, i32) {
    %c0_i32 = arith.constant 0 : i32
    %c0_i32_0 = arith.constant 0 : i32
    return %arg0, %arg1, %c0_i32 : i32, i32, i32
  }
  func.func @transform_1(%arg0: i32, %arg1: i32) -> (i32, i32) {
    %c0_i32 = arith.constant 0 : i32
    %c0_i32_0 = arith.constant 0 : i32
    %c0_i32_1 = arith.constant 0 : i32
    return %c0_i32, %c0_i32_0 : i32, i32
  }
  func.func @transform_2(%arg0: i32, %arg1: i32) -> (i32, i32) {
    %c0_i32 = arith.constant 0 : i32
    %c0_i32_0 = arith.constant 0 : i32
    %c0_i32_1 = arith.constant 0 : i32
    return %c0_i32, %c0_i32_0 : i32, i32
  }
  func.func @transform_3(%arg0: i32, %arg1: i32) -> (i32, i32, i32, i32, i32) {
    %c0_i32 = arith.constant 0 : i32
    %c0_i32_0 = arith.constant 0 : i32
    %c0_i32_1 = arith.constant 0 : i32
    %c0_i32_2 = arith.constant 0 : i32
    return %arg0, %c0_i32, %c0_i32_0, %arg1, %c0_i32_1 : i32, i32, i32, i32, i32
  }
  func.func @transform_4(%arg0: i32, %arg1: i32) -> (i32, i32, i32, i32) {
    %c0_i32 = arith.constant 0 : i32
    %c0_i32_0 = arith.constant 0 : i32
    %c0_i32_1 = arith.constant 0 : i32
    return %arg0, %c0_i32, %arg1, %c0_i32_0 : i32, i32, i32, i32
  }
}

</mosaic_0001>

<llo_original>
// kernel: tpu_custom_call.1
$region0: #{tpu_custom_call.1}
  #allocation0 [shape = 'u32[]', space=smem, size = 0x4, offset = 0x4, fixed_abs, tag = 'smem constant byte address 0x4 - core index']
  #allocation1 [shape = 'u32[144,128]{1,0:T(1,128)}', space=vmem, size = 0x12000, scoped, tag = 'internal scratch']
  %s0 = inlined_call_operand.hbm [shape: f32[2,8,32], index: 0, kind: input, shape index: {}]
  %s1 = inlined_call_operand.hbm [shape: f32[32,96], index: 1, kind: input, shape index: {}]
  %s2 = inlined_call_operand.vmem [shape: f32[1,96], index: 2, kind: input, shape index: {}]
  %s3 = inlined_call_operand.hbm [shape: f32[2,2,4,8,8], index: 3, kind: output, shape index: {0}]
  %s4 = inlined_call_operand.hbm [shape: f32[2,4,8,8], index: 4, kind: output, shape index: {1}]
  %5 = xla_tuple %s3, %s4
  %s6 = sld [smem:[#allocation0]]
  $region61: #{tpu_custom_call.1} parent=0
    _
  %s8 = ssub.s32 1, %s6
  %s9 = scalar_select 0, %s8, %s6
  $region1: #{tpu_custom_call.1} parent=0
    #allocation2 [shape = 'u8[8192]{0}', space=vmem, size = 0x2000, scoped, tag = 'input window, operand 0']
    #allocation3 [shape = 's32[2]{0}', space=sflag, size = 0x8, scoped, tag = 'scoped memory for tpu_custom_call.1']
    #allocation4 [shape = 's32[2]{0}', space=sflag, size = 0x8, scoped, tag = 'scoped memory for tpu_custom_call.1']
    #allocation5 [shape = 'u8[16384]{0}', space=vmem, size = 0x4000, scoped, tag = 'input window, operand 1, single buffered']
    #allocation6 [shape = 's32[1]{0}', space=sflag, size = 0x4, scoped, tag = 'scoped memory for tpu_custom_call.1']
    #allocation7 [shape = 'u8[65536]{0}', space=vmem, size = 0x10000, scoped, tag = 'output window, operand 0']
    #allocation8 [shape = 'u8[32768]{0}', space=vmem, size = 0x8000, scoped, tag = 'output window, operand 1']
    #allocation9 [shape = 's32[2]{0}', space=sflag, size = 0x8, scoped, tag = 'scoped memory for tpu_custom_call.1']
    %10 = vsyncpa [#allocation3], 0
    %s11 = scalar_lea.sflag [#allocation3], 1
    %12 = vsyncpa %s11, 0
    %13 = vsyncpa [#allocation6], 0
    %14 = vsyncpa [#allocation4], 0
    %s15 = scalar_lea.sflag [#allocation4], 1
    %16 = vsyncpa %s15, 0
    %17 = vsyncpa [#allocation9], 0
    %s18 = scalar_lea.sflag [#allocation9], 1
    %19 = vsyncpa %s18, 0
    loop: start=0, step=1, limit=4
    $region2: #{tpu_custom_call.1} parent=1 // loop_pre_header
      _
    $region3: #{tpu_custom_call.1} parent=1 // loop_header
      %s21 = sphi 0, %s25
      %p22 = scmp.ge.s32.totalorder %s21, 4
      %s28 = sphi 0, %s40
      %s29 = sphi 0, %s36
      %s30 = sphi 0, %s28
      %s31 = sphi 0, %s29
      %s32 = sphi 0, %s30
      %s33 = sphi 0, %s31
      %s45 = sphi 0, %s47
      %s48 = sphi 0, %s45
      %s49 = sphi 0, %s48
      %s65 = sphi 0, %s49
      %s69 = sphi 0, %s69
      %s71 = sphi 0, %s69
      %s72 = sphi 0, %s71
      %s86 = sphi 0, %s72
      %s90 = sphi 0, %s90
      %s92 = sphi 0, %s90
      %s93 = sphi 0, %s92
      %s107 = sphi 0, %s93
      %s115 = sphi 0, %s117
      %s118 = sphi 0, %s115
      %s119 = sphi 0, %s118
      %s135 = sphi 0, %s119
      %s143 = sphi 0, %s145
      %s146 = sphi 0, %s143
      %s147 = sphi 0, %s146
      %s163 = sphi 0, %s147
    $region4: #{tpu_custom_call.1} parent=1 // loop_header_branch
      %24 = sbr.rel (%p22) target = $region8
    $region5: #{tpu_custom_call.1} parent=1 // loop_body
      %s26 = ssub.s32 %s21, 1
      %s27 = ssub.s32 %s21, 2
      %s34 = sadd.s32 1, %s29
      %p35 = scmp.ge.s32.totalorder %s34, 1
      %s36 = scalar_select %p35, 0, %s34
      %s37 = sadd.s32 1, %s28
      %s38 = scalar_select %p35, %s37, %s28
      %p39 = scmp.ge.s32.totalorder %s38, 2
      %s40 = scalar_select %p39, 0, %s38
      %s41 = ssub.s32 %s28, %s40
      %s42 = ssub.s32 %s29, %s36
      %s43 = sor.u32 %s41, %s42
      %p44 = scmp.eq.s32.totalorder %s43, 0
      %s46 = sadd.s32 %s45, 1
      %s47 = scalar_select %p44, %s45, %s46
      %p50 = pneg %p44
      %p51 = scmp.eq.s32.totalorder %s21, 1
      %p52 = por %p50, %p51
      %p53 = scmp.ne.s32.totalorder %s45, %s48
      %p54 = scmp.eq.s32.totalorder %s21, 0
      %p55 = por %p53, %p54
      %p56 = scmp.ne.s32.totalorder %s45, %s48
      %p57 = scmp.eq.s32.totalorder %s26, 1
      %p58 = por %p56, %p57
      %p59 = scmp.ne.s32.totalorder %s48, %s49
      %p60 = scmp.eq.s32.totalorder %s26, 0
      %p61 = por %p59, %p60
      %p62 = scmp.ne.s32.totalorder %s48, %s49
      %p63 = scmp.eq.s32.totalorder %s27, 1
      %p64 = por %p62, %p63
      %p66 = scmp.ne.s32.totalorder %s49, %s65
      %p67 = scmp.eq.s32.totalorder %s27, 0
      %p68 = por %p66, %p67
      %s70 = sadd.s32 %s69, 1
      %p73 = scmp.eq.s32.totalorder %s21, 1
      %p74 = scmp.ne.s32.totalorder %s69, %s71
      %p75 = scmp.eq.s32.totalorder %s21, 0
      %p76 = por %p74, %p75
      %p77 = scmp.ne.s32.totalorder %s69, %s71
      %p78 = scmp.eq.s32.totalorder %s26, 1
      %p79 = por %p77, %p78
      %p80 = scmp.ne.s32.totalorder %s71, %s72
      %p81 = scmp.eq.s32.totalorder %s26, 0
      %p82 = por %p80, %p81
      %p83 = scmp.ne.s32.totalorder %s71, %s72
      %p84 = scmp.eq.s32.totalorder %s27, 1
      %p85 = por %p83, %p84
      %p87 = scmp.ne.s32.totalorder %s72, %s86
      %p88 = scmp.eq.s32.totalorder %s27, 0
      %p89 = por %p87, %p88
      %s91 = sadd.s32 %s90, 1
      %p94 = scmp.eq.s32.totalorder %s21, 1
      %p95 = scmp.ne.s32.totalorder %s90, %s92
      %p96 = scmp.eq.s32.totalorder %s21, 0
      %p97 = por %p95, %p96
      %p98 = scmp.ne.s32.totalorder %s90, %s92
      %p99 = scmp.eq.s32.totalorder %s26, 1
      %p100 = por %p98, %p99
      %p101 = scmp.ne.s32.totalorder %s92, %s93
      %p102 = scmp.eq.s32.totalorder %s26, 0
      %p103 = por %p101, %p102
      %p104 = scmp.ne.s32.totalorder %s92, %s93
      %p105 = scmp.eq.s32.totalorder %s27, 1
      %p106 = por %p104, %p105
      %p108 = scmp.ne.s32.totalorder %s93, %s107
      %p109 = scmp.eq.s32.totalorder %s27, 0
      %p110 = por %p108, %p109
      %s111 = ssub.s32 %s28, %s40
      %s112 = ssub.s32 %s29, %s36
      %s113 = sor.u32 %s111, %s112
      %p114 = scmp.eq.s32.totalorder %s113, 0
      %s116 = sadd.s32 %s115, 1
      %s117 = scalar_select %p114, %s115, %s116
      %p120 = pneg %p114
      %p121 = scmp.eq.s32.totalorder %s21, 1
      %p122 = por %p120, %p121
      %p123 = scmp.ne.s32.totalorder %s115, %s118
      %p124 = scmp.eq.s32.totalorder %s21, 0
      %p125 = por %p123, %p124
      %p126 = scmp.ne.s32.totalorder %s115, %s118
      %p127 = scmp.eq.s32.totalorder %s26, 1
      %p128 = por %p126, %p127
      %p129 = scmp.ne.s32.totalorder %s118, %s119
      %p130 = scmp.eq.s32.totalorder %s26, 0
      %p131 = por %p129, %p130
      %p132 = scmp.ne.s32.totalorder %s118, %s119
      %p133 = scmp.eq.s32.totalorder %s27, 1
      %p134 = por %p132, %p133
      %p136 = scmp.ne.s32.totalorder %s119, %s135
      %p137 = scmp.eq.s32.totalorder %s27, 0
      %p138 = por %p136, %p137
      %s139 = ssub.s32 %s28, %s40
      %s140 = ssub.s32 %s29, %s36
      %s141 = sor.u32 %s139, %s140
      %p142 = scmp.eq.s32.totalorder %s141, 0
      %s144 = sadd.s32 %s143, 1
      %s145 = scalar_select %p142, %s143, %s144
      %p148 = pneg %p142
      %p149 = scmp.eq.s32.totalorder %s21, 1
      %p150 = por %p148, %p149
      %p151 = scmp.ne.s32.totalorder %s143, %s146
      %p152 = scmp.eq.s32.totalorder %s21, 0
      %p153 = por %p151, %p152
      %p154 = scmp.ne.s32.totalorder %s143, %s146
      %p155 = scmp.eq.s32.totalorder %s26, 1
      %p156 = por %p154, %p155
      %p157 = scmp.ne.s32.totalorder %s146, %s147
      %p158 = scmp.eq.s32.totalorder %s26, 0
      %p159 = por %p157, %p158
      %p160 = scmp.ne.s32.totalorder %s146, %s147
      %p161 = scmp.eq.s32.totalorder %s27, 1
      %p162 = por %p160, %p161
      %p164 = scmp.ne.s32.totalorder %s147, %s163
      %p165 = scmp.eq.s32.totalorder %s27, 0
      %p166 = por %p164, %p165
      %p167 = scmp.le.s32.totalorder 1, %s21
      %p168 = scmp.lt.s32.totalorder %s21, 3
      %p169 = pnand %p167, %p168
      %p170 = pneg %p169
      // Predicated region
      $region9: #{tpu_custom_call.1} parent=5 // pred_check
        _
      $region10: #{tpu_custom_call.1} parent=5 // pred_check_branch
        %172 = sbr.rel (%p169) target = $region12
      $region11: #{tpu_custom_call.1} parent=5 // pred_region
        %s173 = ssub.s32 %s21, 1
        // Predicated region
        $region13: #{tpu_custom_call.1} parent=11 // pred_check
          %p174 = pneg %p82
        $region14: #{tpu_custom_call.1} parent=11 // pred_check_branch
          %176 = sbr.rel (%p174) target = $region16
        $region15: #{tpu_custom_call.1} parent=11 // pred_region
          %s178 = ssub.s32 512, 512
          %179 = vsyncadd [#allocation6], %s178
          %s180 = sshll.u32 [#allocation5], 4
          %s181 = int_to_ptr.vmem [resolvable:$true] %s180
          %186 = dma.hbm_to_vmem [thread:$0]  %s1, 512, %s181, [#allocation6], 128, 128, 8
        $region16: #{tpu_custom_call.1} parent=11 // pred_fallthru
          _
        // Predicated region
        $region17: #{tpu_custom_call.1} parent=11 // pred_check
          %p187 = pneg %p103
        $region18: #{tpu_custom_call.1} parent=11 // pred_check_branch
          %189 = sbr.rel (%p187) target = $region20
        $region19: #{tpu_custom_call.1} parent=11 // pred_region
          _
        $region20: #{tpu_custom_call.1} parent=11 // pred_fallthru
          _
      $region12: #{tpu_custom_call.1} parent=5 // pred_fallthru
        _
      %p190 = scmp.lt.s32.totalorder %s21, 2
      // Predicated region
      $region21: #{tpu_custom_call.1} parent=5 // pred_check
        %p191 = pneg %p190
      $region22: #{tpu_custom_call.1} parent=5 // pred_check_branch
        %193 = sbr.rel (%p191) target = $region24
      $region23: #{tpu_custom_call.1} parent=5 // pred_region
        // Predicated region
        $region25: #{tpu_custom_call.1} parent=23 // pred_check
          %p194 = pneg %p55
        $region26: #{tpu_custom_call.1} parent=23 // pred_check_branch
          %196 = sbr.rel (%p194) target = $region28
        $region27: #{tpu_custom_call.1} parent=23 // pred_region
          %s197 = sand.u32 %s45, 1
          %s198 = scalar_lea.sflag [#allocation3], %s197
          %s199 = sand.u32 %s45, 1
          %s200 = smul.addr %s199, 8
          %s201 = scalar_lea.vmem [#allocation2], %s200
          %s203 = ssub.s32 128, 128
          %204 = vsyncadd %s198, %s203
          %s205 = sadd.s32 %s29, %s28
          %s206 = smul.addr %s205, 128
          %s207 = scalar_lea.hbm %s0, %s206
          %s209 = sshll.u32 %s201, 4
          %s210 = int_to_ptr.vmem [resolvable:$true] %s209
          %212 = dma.hbm_to_vmem [thread:$0]  %s207, 128, %s210, %s198
        $region28: #{tpu_custom_call.1} parent=23 // pred_fallthru
          _
      $region24: #{tpu_custom_call.1} parent=5 // pred_fallthru
        _
      %p213 = scmp.le.s32.totalorder 1, %s21
      %p214 = scmp.lt.s32.totalorder %s21, 3
      %p215 = pnand %p213, %p214
      %p216 = pneg %p215
      // Predicated region
      $region29: #{tpu_custom_call.1} parent=5 // pred_check
        _
      $region30: #{tpu_custom_call.1} parent=5 // pred_check_branch
        %218 = sbr.rel (%p215) target = $region32
      $region31: #{tpu_custom_call.1} parent=5 // pred_region
        %s219 = ssub.s32 %s21, 1
        %s220 = sand.u32 %s48, 1
        %s221 = scalar_lea.sflag [#allocation3], %s220
        %s222 = sand.u32 %s48, 1
        %s223 = smul.addr %s222, 8
        %s224 = scalar_lea.vmem [#allocation2], %s223
        // Predicated region
        $region33: #{tpu_custom_call.1} parent=31 // pred_check
          %p225 = pneg %p61
        $region34: #{tpu_custom_call.1} parent=31 // pred_check_branch
          %227 = sbr.rel (%p225) target = $region36
        $region35: #{tpu_custom_call.1} parent=31 // pred_region
          %228 = dma.done %s221, 128
        $region36: #{tpu_custom_call.1} parent=31 // pred_fallthru
          _
        // Predicated region
        $region37: #{tpu_custom_call.1} parent=31 // pred_check
          %p229 = pneg %p82
        $region38: #{tpu_custom_call.1} parent=31 // pred_check_branch
          %231 = sbr.rel (%p229) target = $region40
        $region39: #{tpu_custom_call.1} parent=31 // pred_region
          %232 = dma.done [#allocation6], 512
        $region40: #{tpu_custom_call.1} parent=31 // pred_fallthru
          _
        %s233 = sand.u32 %s48, 1
        %s234 = scalar_lea.sflag [#allocation3], %s233
        %s235 = sand.u32 %s48, 1
        %s236 = smul.addr %s235, 8
        %s237 = scalar_lea.vmem [#allocation2], %s236
        %p238 = pneg %p61
        %p239 = pneg %p58
        %p240 = pneg %p82
        %p241 = pneg %p79
        %p242 = pneg %p103
        %p243 = pneg %p100
        %p244 = pneg %p131
        %p245 = pneg %p128
        %s246 = sand.u32 %s118, 1
        %s247 = scalar_lea.sflag [#allocation4], %s246
        %s248 = sand.u32 %s118, 1
        %s249 = smul.addr %s248, 64
        %s250 = scalar_lea.vmem [#allocation7], %s249
        %p251 = pneg %p159
        %p252 = pneg %p156
        %s253 = sand.u32 %s146, 1
        %s254 = scalar_lea.sflag [#allocation9], %s253
        %s255 = sand.u32 %s146, 1
        %s256 = smul.addr %s255, 32
        %s257 = scalar_lea.vmem [#allocation8], %s256
        %v258 = vld [vmem:[%s224] sm:$0xff]
        %v259 = vld [vmem:[#allocation5] sm:$0xff]
        %v260 = vld [vmem:[#allocation5 + $0x8] sm:$0xff]
        %v261 = vld [vmem:[#allocation5 + $0x10] sm:$0xff]
        %v262 = vld [vmem:[#allocation5 + $0x18] sm:$0xff]
        %v263 = vld [vmem:[%s2] sm:$0x1]
        %v265 = vlaneseq
        %v266 = vshrl.u32 %v265, 7
        %v267 = vsub.s32 0, %v266
        %v268 = vrot.slane %v263, %v267
        %vm270 = vcmask 261120
        %v272 = vsel %vm270, %v258, 0
        %274 = vmatprep.subr.mxu0 0.0
        %275 = vmatpush1.msra.mxu0 %v259
        %276 = vmatprep.subr.mxu0 0.0
        %277 = vmatpush1.msra.mxu0 %v260
        %278 = vmatprep.subr.mxu0 0.0
        %279 = vmatpush1.msra.mxu0 %v261
        %280 = vmatprep.subr.mxu0 0.0
        %281 = vmatpush1.msra.mxu0 %v262
        %282 = vmatprep.subr.mxu0 0.0
        %283 = vmatpush1.msra.mxu0 0.0
        %284 = vmatprep.subr.mxu0 0.0
        %285 = vmatpush1.msra.mxu0 0.0
        %286 = vmatprep.subr.mxu0 0.0
        %287 = vmatpush1.msra.mxu0 0.0
        %288 = vmatprep.subr.mxu0 0.0
        %289 = vmatpush1.msra.mxu0 0.0
        %290 = vmatprep.subr.mxu0 0.0
        %291 = vmatpush1.msra.mxu0 0.0
        %292 = vmatprep.subr.mxu0 0.0
        %293 = vmatpush1.msra.mxu0 0.0
        %294 = vmatprep.subr.mxu0 0.0
        %295 = vmatpush1.msra.mxu0 0.0
        %296 = vmatprep.subr.mxu0 0.0
        %297 = vmatpush1.msra.mxu0 0.0
        %298 = vmatprep.subr.mxu0 0.0
        %299 = vmatpush1.msra.mxu0 0.0
        %300 = vmatprep.subr.mxu0 0.0
        %301 = vmatpush1.msra.mxu0 0.0
        %302 = vmatprep.subr.mxu0 0.0
        %303 = vmatpush1.msra.mxu0 0.0
        %304 = vmatprep.subr.mxu0 0.0
        %305 = vmatpush1.msra.mxu0 0.0
        %306 = vmatprep.subr.mxu0 0.0
        %307 = vmatpush1.msra.mxu0 0.0
        %308 = vmatprep.subr.mxu0 0.0
        %309 = vmatpush1.msra.mxu0 0.0
        %310 = vmatprep.subr.mxu0 0.0
        %311 = vmatpush1.msra.mxu0 0.0
        %312 = vmatprep.subr.mxu0 0.0
        %313 = vmatpush1.msra.mxu0 0.0
        %314 = vmatprep.subr.mxu0 0.0
        %315 = vmatpush1.msra.mxu0 0.0
        %316 = vmatprep.subr.mxu0 0.0
        %317 = vmatpush1.msra.mxu0 0.0
        %318 = vmatprep.subr.mxu0 0.0
        %319 = vmatpush1.msra.mxu0 0.0
        %320 = vmatprep.subr.mxu0 0.0
        %321 = vmatpush1.msra.mxu0 0.0
        %322 = vmatprep.subr.mxu0 0.0
        %323 = vmatpush1.msra.mxu0 0.0
        %324 = vmatprep.subr.mxu0 0.0
        %325 = vmatpush1.msra.mxu0 0.0
        %326 = vmatprep.subr.mxu0 0.0
        %327 = vmatpush1.msra.mxu0 0.0
        %328 = vmatprep.subr.mxu0 0.0
        %329 = vmatpush1.msra.mxu0 0.0
        %330 = vmatprep.subr.mxu0 0.0
        %331 = vmatpush1.msra.mxu0 0.0
        %332 = vmatprep.subr.mxu0 0.0
        %333 = vmatpush1.msra.mxu0 0.0
        %334 = vmatprep.subr.mxu0 0.0
        %335 = vmatpush1.msra.mxu0 0.0
        %336 = vmatprep.subr.mxu0 0.0
        %337 = vmatpush1.msra.mxu0 0.0
        %338 = vmatprep.mubr.f32.mxu0 0.0
        %339 = vmatmul.mubr.f32.gmra.mrb[0].mxu0 %v272
        %v340 = vpop.f32.mrb[0].mxu0
        %v341 = vadd.f32 %v268, %v340
        %v342 = vpop.f32.mrb[0].mxu0
        %343 = vdwg.mxu0
        %v344 = vmul.f32 %v341, 0.35355338
        %346 = vrot.lane.b32.xlu0 %v341, 96
        %v347 = vpop.permute.xlu0 %346
        %vm349 = vcmask 64512
        %350 = vst.msk [vmem:[%s250] sm:$0xff] %vm349, %v347
        %351 = vrot.lane.b32.xlu0 %v341, 64
        %v352 = vpop.permute.xlu0 %351
        %s354 = scalar_lea.vmem %s250, 32 [#allocation7]
        %355 = vst.msk [vmem:[%s354] sm:$0xff] %vm349, %v352
        %356 = vst.msk [vmem:[%s257] sm:$0xff] %vm349, %v344
        %357 = vrot.lane.b32.xlu0 %v341, 88
        %v358 = vpop.permute.xlu0 %357
        %s360 = scalar_lea.vmem %s250, 8 [#allocation7]
        %361 = vst.msk [vmem:[%s360] sm:$0xff] %vm349, %v358
        %362 = vrot.lane.b32.xlu0 %v341, 56
        %v363 = vpop.permute.xlu0 %362
        %s365 = scalar_lea.vmem %s250, 40 [#allocation7]
        %366 = vst.msk [vmem:[%s365] sm:$0xff] %vm349, %v363
        %368 = vrot.lane.b32.xlu0 %v344, 120
        %v369 = vpop.permute.xlu0 %368
        %s371 = scalar_lea.vmem %s257, 8 [#allocation8]
        %372 = vst.msk [vmem:[%s371] sm:$0xff] %vm349, %v369
        %373 = vrot.lane.b32.xlu0 %v341, 80
        %v374 = vpop.permute.xlu0 %373
        %s376 = scalar_lea.vmem %s250, 16 [#allocation7]
        %377 = vst.msk [vmem:[%s376] sm:$0xff] %vm349, %v374
        %378 = vrot.lane.b32.xlu0 %v341, 48
        %v379 = vpop.permute.xlu0 %378
        %s381 = scalar_lea.vmem %s250, 48 [#allocation7]
        %382 = vst.msk [vmem:[%s381] sm:$0xff] %vm349, %v379
        %383 = vrot.lane.b32.xlu0 %v344, 112
        %v384 = vpop.permute.xlu0 %383
        %s386 = scalar_lea.vmem %s257, 16 [#allocation8]
        %387 = vst.msk [vmem:[%s386] sm:$0xff] %vm349, %v384
        %388 = vrot.lane.b32.xlu0 %v341, 72
        %v389 = vpop.permute.xlu0 %388
        %s391 = scalar_lea.vmem %s250, 24 [#allocation7]
        %392 = vst.msk [vmem:[%s391] sm:$0xff] %vm349, %v389
        %393 = vrot.lane.b32.xlu0 %v341, 40
        %v394 = vpop.permute.xlu0 %393
        %s396 = scalar_lea.vmem %s250, 56 [#allocation7]
        %397 = vst.msk [vmem:[%s396] sm:$0xff] %vm349, %v394
        %398 = vrot.lane.b32.xlu0 %v344, 104
        %v399 = vpop.permute.xlu0 %398
        %s401 = scalar_lea.vmem %s257, 24 [#allocation8]
        %402 = vst.msk [vmem:[%s401] sm:$0xff] %vm349, %v399
        %s403 = sand.u32 %s118, 1
        %s404 = scalar_lea.sflag [#allocation4], %s403
        %s405 = sand.u32 %s118, 1
        %s406 = smul.addr %s405, 64
        %s407 = scalar_lea.vmem [#allocation7], %s406
        %s408 = sand.u32 %s146, 1
        %s409 = scalar_lea.sflag [#allocation9], %s408
        %s410 = sand.u32 %s146, 1
        %s411 = smul.addr %s410, 32
        %s412 = scalar_lea.vmem [#allocation8], %s411
        // Predicated region
        $region41: #{tpu_custom_call.1} parent=31 // pred_check
          %p413 = pneg %p128
        $region42: #{tpu_custom_call.1} parent=31 // pred_check_branch
          %415 = sbr.rel (%p413) target = $region44
        $region43: #{tpu_custom_call.1} parent=31 // pred_region
          %s417 = ssub.s32 1024, 1024
          %418 = vsyncadd %s404, %s417
          %s419 = smul.addr %s30, 8
          %s420 = sadd.s32 %s31, %s419
          %s421 = smul.addr %s420, 128
          %s422 = scalar_lea.hbm %s3, %s421
          %s423 = sshll.u32 %s407, 4
          %s424 = int_to_ptr.vmem [resolvable:$true] %s423
          %429 = dma.vmem_to_hbm [thread:$0]  %s424, 1024, %s422, %s404, 128, 128, 8
        $region44: #{tpu_custom_call.1} parent=31 // pred_fallthru
          _
        // Predicated region
        $region45: #{tpu_custom_call.1} parent=31 // pred_check
          %p430 = pneg %p156
        $region46: #{tpu_custom_call.1} parent=31 // pred_check_branch
          %432 = sbr.rel (%p430) target = $region48
        $region47: #{tpu_custom_call.1} parent=31 // pred_region
          %s434 = ssub.s32 512, 512
          %435 = vsyncadd %s409, %s434
          %s436 = smul.addr %s30, 4
          %s437 = sadd.s32 %s31, %s436
          %s438 = smul.addr %s437, 128
          %s439 = scalar_lea.hbm %s4, %s438
          %s440 = sshll.u32 %s412, 4
          %s441 = int_to_ptr.vmem [resolvable:$true] %s440
          %446 = dma.vmem_to_hbm [thread:$0]  %s441, 512, %s439, %s409, 128, 128, 8
        $region48: #{tpu_custom_call.1} parent=31 // pred_fallthru
          _
      $region32: #{tpu_custom_call.1} parent=5 // pred_fallthru
        _
      %p447 = scmp.le.s32.totalorder 2, %s21
      // Predicated region
      $region49: #{tpu_custom_call.1} parent=5 // pred_check
        %p448 = pneg %p447
      $region50: #{tpu_custom_call.1} parent=5 // pred_check_branch
        %450 = sbr.rel (%p448) target = $region52
      $region51: #{tpu_custom_call.1} parent=5 // pred_region
        %s451 = ssub.s32 %s21, 2
        // Predicated region
        $region53: #{tpu_custom_call.1} parent=51 // pred_check
          %p452 = pneg %p134
        $region54: #{tpu_custom_call.1} parent=51 // pred_check_branch
          %454 = sbr.rel (%p452) target = $region56
        $region55: #{tpu_custom_call.1} parent=51 // pred_region
          %s455 = sand.u32 %s119, 1
          %s456 = scalar_lea.sflag [#allocation4], %s455
          %s457 = sand.u32 %s119, 1
          %s458 = smul.addr %s457, 64
          %s459 = scalar_lea.vmem [#allocation7], %s458
          %460 = dma.done %s456, 1024
        $region56: #{tpu_custom_call.1} parent=51 // pred_fallthru
          _
        // Predicated region
        $region57: #{tpu_custom_call.1} parent=51 // pred_check
          %p461 = pneg %p162
        $region58: #{tpu_custom_call.1} parent=51 // pred_check_branch
          %463 = sbr.rel (%p461) target = $region60
        $region59: #{tpu_custom_call.1} parent=51 // pred_region
          %s464 = sand.u32 %s147, 1
          %s465 = scalar_lea.sflag [#allocation9], %s464
          %s466 = sand.u32 %s147, 1
          %s467 = smul.addr %s466, 32
          %s468 = scalar_lea.vmem [#allocation8], %s467
          %469 = dma.done %s465, 512
        $region60: #{tpu_custom_call.1} parent=51 // pred_fallthru
          _
      $region52: #{tpu_custom_call.1} parent=5 // pred_fallthru
        _
    $region6: #{tpu_custom_call.1} parent=1 // loop_footer
      %s25 = sadd.s32 1, %s21
    $region7: #{tpu_custom_call.1} parent=1 // loop_footer_branch
      %20 = sbr.rel target = $region3
    $region8: #{tpu_custom_call.1} parent=1 // loop_exit
      _
    %470 = vsyncpa [#allocation3], 1
    %s471 = scalar_lea.sflag [#allocation3], 1
    %472 = vsyncpa %s471, 1
    %473 = vsyncpa [#allocation6], 1
    %474 = vsyncpa [#allocation4], 1
    %s475 = scalar_lea.sflag [#allocation4], 1
    %476 = vsyncpa %s475, 1
    %477 = vsyncpa [#allocation9], 1
    %s478 = scalar_lea.sflag [#allocation9], 1
    %479 = vsyncpa %s478, 1

</llo_original>
